<compile_context>
chip_gen: v5e
topology: v5e:2x2
jax: 0.10.0
libtpu: 0.0.40
codegen_flags: <defaults>
</compile_context>

<pallas_src>
import jax
import jax.numpy as jnp
from jax.experimental import pallas as pl
from jax.experimental.pallas import tpu as pltpu

# ----- module hyper-parameters (match AdaLogLLMQuantizer.__init__ defaults) --
N_BITS = 4
N_LEVELS = 2 ** (N_BITS - 1)      # 8
NUM_CLUSTERS = 2
R = 37.0
BIAS_REPARAMED = False            # buffer 'bias_reparamed' = False

LANE = 128
SUBLANE = 8
TARGET_BLOCK_BYTES = 4 << 20      # 4 MiB per (block_rows, 128) buffer
VMEM_LIMIT_BYTES = 32 << 20       # safe scoped-VMEM request on v5e/v6e/v7x

# Packed scalar-parameter layout (single SMEM f32 array):
#   [0] shift
#   [1] scale
#   [2] t0            valid-threshold on l2 = log2(shifted):
#                       t0 = +inf        if ca[0] < 0  (every element valid)
#                            -ca[0]      otherwise
#   [3 .. 3+C-2]      nca[c] = -ca[c]            for c = 1..C-1
#   [.. + C]          nrq[c] = -R / q[c]         for c = 0..C-1
#   [.. + C]          nqr[c] = -q[c] / R         for c = 0..C-1
_T0_IDX = 2
_NCA_OFF = 3
_NRQ_OFF = _NCA_OFF + NUM_CLUSTERS - 1
_NQR_OFF = _NRQ_OFF + NUM_CLUSTERS
_N_PARAMS = _NQR_OFF + NUM_CLUSTERS


def _adalog_kernel(p_ref, x_ref, o_ref):
    """Mixture-of-log quantize/dequantize on one (block_rows, 128) tile.

    p_ref        : (_N_PARAMS,) f32 SMEM  packed scalars (see layout above)
    x_ref, o_ref : (block_rows, 128) VMEM tiles (caller dtype preserved)
    """
    shift = p_ref[0]
    scale = p_ref[1]
    t0 = p_ref[_T0_IDX]

    x = x_ref[...].astype(jnp.float32)
    s = jnp.maximum(x + shift, 1e-15)          # lower clamp only (see header)
    l2 = jnp.log2(s)                           # log_x == -l2 ; negate folded
                                               # into the precomputed scalars

    # "no cluster matched -> dequant 0" boundary, equivalent to the reference's
    # (clamped) log_x > ca[0] for any sign of ca[0].
    valid = l2 < t0

    # Per-element selection of the cluster's precomputed scalars (VALU selects
    # with splatted scalars; tiny static loop -> unrolled).
    nrq = p_ref[_NRQ_OFF]                      # -R / q[0]
    nqr = p_ref[_NQR_OFF]                      # -q[0] / R
    for c in range(1, NUM_CLUSTERS):
        hi = l2 < p_ref[_NCA_OFF + c - 1]      # == log_x > ca[c]
        nrq = jnp.where(hi, p_ref[_NRQ_OFF + c], nrq)
        nqr = jnp.where(hi, p_ref[_NQR_OFF + c], nqr)

    max_code = jnp.float32(2 * N_LEVELS - 1)
    x_quant = jnp.clip(jnp.round(l2 * nrq), 0.0, max_code)   # round(log_x*R/q)
    val = jnp.exp2(x_quant * nqr) * scale                    # single exp2/elem
    dequant = jnp.where(valid, val, 0.0)

    if not BIAS_REPARAMED:
        dequant = dequant - shift

    o_ref[...] = dequant.astype(o_ref.dtype)


def _pick_block_rows(rows, itemsize):
    """Largest legal block that (a) stays near TARGET_BLOCK_BYTES per buffer,
    (b) keeps the grid length >= 2 for non-trivial tensors (v7x megacore),
    (c) keeps sublane-packing legality (x8 rows f32 / x16 rows bf16)."""
    row_align = SUBLANE * max(1, 4 // itemsize)        # 8 f32, 16 bf16
    target = max(row_align, TARGET_BLOCK_BYTES // (LANE * itemsize))
    if rows <= 2 * row_align:
        return rows                                    # tiny: one full block
    half = -(-rows // 2)                               # cdiv(rows, 2)
    half = -(-half // row_align) * row_align           # round up to alignment
    return min(target, half)


@jax.jit
def adalog_quantize(x, shift, scale, cluster_assignments, q_values):
    """Pallas-backed forward of AdaLogLLMQuantizer.

    x: any shape / dtype (f32 or bf16); shift, scale: (1,);
    cluster_assignments, q_values: (NUM_CLUSTERS,).
    Returns same shape/dtype as x.
    """
    orig_shape = x.shape
    flat = x.reshape(-1)
    n = flat.shape[0]

    # Common LLM case (numel % 128 == 0): pure reshape, zero extra HBM passes.
    # TODO(synk): ragged numel falls back to a pad/slice pair (one extra HBM
    # pass each way); a zero-copy in-kernel tail mask needs a 1-D / manual-DMA
    # path that is not worth the complexity for this rare case.
    pad = (-n) % LANE
    if pad:
        flat = jnp.pad(flat, (0, pad))
    rows = flat.shape[0] // LANE
    x2d = flat.reshape(rows, LANE)

    block_rows = _pick_block_rows(rows, x2d.dtype.itemsize)
    grid = (pl.cdiv(rows, block_rows),)

    # Pack all scalars into one f32 SMEM operand.
    q32 = q_values.astype(jnp.float32)
    ca32 = cluster_assignments.astype(jnp.float32)
    r32 = jnp.float32(R)
    t0 = jnp.where(ca32[0] < 0, jnp.inf, -ca32[0]).astype(jnp.float32)
    params = jnp.concatenate([
        shift.astype(jnp.float32).reshape(1),
        scale.astype(jnp.float32).reshape(1),
        t0.reshape(1),
        -ca32[1:],            # nca[1..C-1]
        -(r32 / q32),         # nrq = -R / q
        -(q32 / r32),         # nqr = -q / R
    ])

    param_spec = pl.BlockSpec(memory_space=pltpu.MemorySpace.SMEM)
    tile_spec = pl.BlockSpec((block_rows, LANE), lambda i: (i, 0))

    out2d = pl.pallas_call(
        _adalog_kernel,
        out_shape=jax.ShapeDtypeStruct(x2d.shape, x2d.dtype),
        grid=grid,
        in_specs=[param_spec, tile_spec],
        out_specs=tile_spec,
        compiler_params=pltpu.CompilerParams(
            dimension_semantics=(pltpu.PARALLEL,),
            vmem_limit_bytes=VMEM_LIMIT_BYTES),
    )(params, x2d)

    out = out2d.reshape(-1)
    if pad:
        out = out[:n]
    return out.reshape(orig_shape)


def adalog_reference(x, shift, scale, ca, qv):
    """Pure-JAX mirror of the PyTorch forward (for correctness checking)."""
    shifted = jnp.clip(x + shift, 1e-15, 1.0)
    log_x = -jnp.log2(shifted)
    dq = jnp.zeros_like(x)
    for c in range(NUM_CLUSTERS):
        if c < NUM_CLUSTERS - 1:
            mask = (log_x <= ca[c + 1]) & (log_x > ca[c])
        else:
            mask = log_x > ca[c]
        xq = jnp.clip(jnp.round(log_x * R / qv[c]), 0.0, 2 * N_LEVELS - 1)
        val = jnp.exp2(-(xq * qv[c]) / R) * scale
        dq = jnp.where(mask, val, dq)
    if not BIAS_REPARAMED:
        dq = dq - shift
    return dq


if __name__ == "__main__":
    key = jax.random.PRNGKey(0)

    # Deterministic "calibrated" parameters / buffers (module would set these
    # via cluster_activations(); synthetic values here).
    shift = jnp.array([0.05], dtype=jnp.float32)                  # nn.Parameter shift
    scale = jnp.array([0.75], dtype=jnp.float32)                  # self.scale (set at calibration)
    cluster_assignments = jnp.array([0.0, 4.0], dtype=jnp.float32)
    q_values = jnp.array([37.0, 22.0], dtype=jnp.float32)
    # TODO(synk): cluster_activations()/update_tables() are calibration-time
    # host routines (k-means over -log2 samples, LUT build); not part of forward.

    k1, k2, k3 = jax.random.split(key, 3)
    test_cases = [
        jax.random.uniform(k1, (2, 4, 16, 16), dtype=jnp.float32,
                           minval=-0.2, maxval=1.2),   # NCHW activation, 1 step
        jax.random.uniform(k2, (8, 256, 256), dtype=jnp.float32,
                           minval=-0.2, maxval=1.2),   # multi-step grid (>=2)
        jax.random.uniform(k3, (3, 5, 7), dtype=jnp.float32,
                           minval=-0.2, maxval=1.2),   # ragged-numel fallback
    ]

    for x in test_cases:
        out = adalog_quantize(x, shift, scale, cluster_assignments, q_values)
        jax.block_until_ready(out)
        ref = adalog_reference(x, shift[0], scale[0], cluster_assignments, q_values)
        assert out.shape == x.shape and out.dtype == x.dtype
        assert jnp.allclose(out, ref, atol=1e-5, rtol=1e-5), "kernel/reference mismatch"

    print("KERNEL_OK")
</pallas_src>

<mosaic_0001>
module attributes {stable_mosaic.version = 11 : i64} {
  func.func @_adalog_kernel(%arg0: i32, %arg1: memref<8xf32, #tpu.memory_space<smem>>, %arg2: memref<16x128xf32, #tpu.memory_space<vmem>>, %arg3: memref<16x128xf32, #tpu.memory_space<vmem>>) attributes {dimension_semantics = [#tpu.dimension_semantics<parallel>], iteration_bounds = array<i64: 1>, scalar_prefetch = 0 : i64, scratch_operands = 0 : i64, tpu.core_type = #tpu.core_type<tc>, window_params = [{transform_indices = @transform_0, window_bounds = array<i64: 8>}, {transform_indices = @transform_1, window_bounds = array<i64: 16, 128>}, {transform_indices = @transform_2, window_bounds = array<i64: 16, 128>}]} {
    %c0 = arith.constant 0 : index
    %0 = memref.load %arg1[%c0] : memref<8xf32, #tpu.memory_space<smem>>
    %c1 = arith.constant 1 : index
    %1 = memref.load %arg1[%c1] : memref<8xf32, #tpu.memory_space<smem>>
    %c2 = arith.constant 2 : index
    %2 = memref.load %arg1[%c2] : memref<8xf32, #tpu.memory_space<smem>>
    %c0_0 = arith.constant 0 : index
    %c0_1 = arith.constant 0 : index
    %3 = vector.load %arg2[%c0_0, %c0_1] : memref<16x128xf32, #tpu.memory_space<vmem>>, vector<16x128xf32>
    %4 = vector.broadcast %0 : f32 to vector<16x128xf32>
    %5 = arith.addf %3, %4 : vector<16x128xf32>
    %cst = arith.constant 1.000000e-15 : f32
    %6 = vector.broadcast %cst : f32 to vector<16x128xf32>
    %7 = arith.maximumf %5, %6 : vector<16x128xf32>
    %8 = math.log %7 : vector<16x128xf32>
    %cst_2 = arith.constant 2.000000e+00 : f32
    %9 = math.log %cst_2 : f32
    %10 = vector.broadcast %9 : f32 to vector<16x128xf32>
    %11 = arith.divf %8, %10 : vector<16x128xf32>
    %12 = vector.broadcast %2 : f32 to vector<16x128xf32>
    %13 = arith.cmpf olt, %11, %12 : vector<16x128xf32>
    %c4 = arith.constant 4 : index
    %14 = memref.load %arg1[%c4] : memref<8xf32, #tpu.memory_space<smem>>
    %c6 = arith.constant 6 : index
    %15 = memref.load %arg1[%c6] : memref<8xf32, #tpu.memory_space<smem>>
    %c3 = arith.constant 3 : index
    %16 = memref.load %arg1[%c3] : memref<8xf32, #tpu.memory_space<smem>>
    %17 = vector.broadcast %16 : f32 to vector<16x128xf32>
    %18 = arith.cmpf olt, %11, %17 : vector<16x128xf32>
    %c5 = arith.constant 5 : index
    %19 = memref.load %arg1[%c5] : memref<8xf32, #tpu.memory_space<smem>>
    %20 = vector.broadcast %19 : f32 to vector<16x128xf32>
    %21 = vector.broadcast %14 : f32 to vector<16x128xf32>
    %22 = arith.select %18, %20, %21 : vector<16x128xi1>, vector<16x128xf32>
    %c7 = arith.constant 7 : index
    %23 = memref.load %arg1[%c7] : memref<8xf32, #tpu.memory_space<smem>>
    %24 = vector.broadcast %23 : f32 to vector<16x128xf32>
    %25 = vector.broadcast %15 : f32 to vector<16x128xf32>
    %26 = arith.select %18, %24, %25 : vector<16x128xi1>, vector<16x128xf32>
    %27 = arith.mulf %11, %22 : vector<16x128xf32>
    %28 = math.roundeven %27 : vector<16x128xf32>
    %cst_3 = arith.constant 0.000000e+00 : f32
    %cst_4 = arith.constant 1.500000e+01 : f32
    %29 = vector.broadcast %cst_3 : f32 to vector<16x128xf32>
    %30 = arith.maximumf %29, %28 : vector<16x128xf32>
    %31 = vector.broadcast %cst_4 : f32 to vector<16x128xf32>
    %32 = arith.minimumf %31, %30 : vector<16x128xf32>
    %33 = arith.mulf %32, %26 : vector<16x128xf32>
    %34 = math.exp2 %33 : vector<16x128xf32>
    %35 = vector.broadcast %1 : f32 to vector<16x128xf32>
    %36 = arith.mulf %34, %35 : vector<16x128xf32>
    %cst_5 = arith.constant 0.000000e+00 : f32
    %37 = vector.broadcast %cst_5 : f32 to vector<16x128xf32>
    %38 = arith.select %13, %36, %37 : vector<16x128xi1>, vector<16x128xf32>
    %39 = vector.broadcast %0 : f32 to vector<16x128xf32>
    %40 = arith.subf %38, %39 : vector<16x128xf32>
    %c0_6 = arith.constant 0 : index
    %c0_7 = arith.constant 0 : index
    %41 = vector.load %arg3[%c0_6, %c0_7] : memref<16x128xf32, #tpu.memory_space<vmem>>, vector<16x128xf32>
    tpu.vector_store %arg3[%c0_6, %c0_7], %40 {strides = array<i32>} : memref<16x128xf32, #tpu.memory_space<vmem>>, vector<16x128xf32>,
    return
  }
  func.func @transform_0(%arg0: i32) -> i32 {
    %c0_i32 = arith.constant 0 : i32
    %c0_i32_0 = arith.constant 0 : i32
    return %c0_i32 : i32
  }
  func.func @transform_1(%arg0: i32) -> (i32, i32) {
    %c0_i32 = arith.constant 0 : i32
    %c0_i32_0 = arith.constant 0 : i32
    return %arg0, %c0_i32 : i32, i32
  }
  func.func @transform_2(%arg0: i32) -> (i32, i32) {
    %c0_i32 = arith.constant 0 : i32
    %c0_i32_0 = arith.constant 0 : i32
    return %arg0, %c0_i32 : i32, i32
  }
}

</mosaic_0001>

<llo_original>
// kernel: adalog_quantize.1
$region0: #{adalog_quantize.1}
  #allocation0 [shape = 'u32[]', space=smem, size = 0x4, offset = 0x4, fixed_abs, tag = 'smem constant byte address 0x4 - core index']
  #allocation1 [shape = 'u32[72,128]{1,0:T(1,128)}', space=vmem, size = 0x9000, scoped, tag = 'internal scratch']
  %s0 = inlined_call_operand.vmem [shape: f32[8], index: 0, kind: input, shape index: {}]
  %s1 = inlined_call_operand.vmem [shape: f32[16,128], index: 1, kind: input, shape index: {}]
  %s2 = inlined_call_operand.vmem [shape: f32[16,128], index: 2, kind: output, shape index: {}]
  %s3 = sld [smem:[#allocation0]]
  $region22: #{adalog_quantize.1} parent=0
    _
  %s5 = ssub.s32 1, %s3
  %s6 = scalar_select 0, %s5, %s3
  $region1: #{adalog_quantize.1} parent=0
    #allocation2 [shape = 'u8[512]{0}', space=smem, size = 0x200, scoped, tag = 'input window, operand 0, single buffered']
    #allocation3 [shape = 's32[1]{0}', space=sflag, size = 0x4, scoped, tag = 'scoped memory for adalog_quantize.1']
    %7 = vsyncpa [#allocation3], 0
    // Predicated region
    $region2: #{adalog_quantize.1} parent=1 // pred_check
      _
    $region3: #{adalog_quantize.1} parent=1 // pred_check_branch
      %9 = sbr.rel (0) target = $region5
    $region4: #{adalog_quantize.1} parent=1 // pred_region
      %11 = vsyncadd [#allocation3], 0
      %s13 = sshll.u32 %s0, 4
      %s14 = int_to_ptr.vmem [resolvable:$true] %s13
      %16 = dma.vmem_to_smem %s14, 16, [#allocation2], [#allocation3]
    $region5: #{adalog_quantize.1} parent=1 // pred_fallthru
      _
    // Predicated region
    $region6: #{adalog_quantize.1} parent=1 // pred_check
      _
    $region7: #{adalog_quantize.1} parent=1 // pred_check_branch
      %18 = sbr.rel (0) target = $region9
    $region8: #{adalog_quantize.1} parent=1 // pred_region
      _
    $region9: #{adalog_quantize.1} parent=1 // pred_fallthru
      _
    // Predicated region
    $region10: #{adalog_quantize.1} parent=1 // pred_check
      _
    $region11: #{adalog_quantize.1} parent=1 // pred_check_branch
      %20 = sbr.rel (0) target = $region13
    $region12: #{adalog_quantize.1} parent=1 // pred_region
      %22 = dma.done [#allocation3], 16
    $region13: #{adalog_quantize.1} parent=1 // pred_fallthru
      _
    %23 = sfence
    %s24 = sld [smem:[#allocation2]]
    %s25 = sld [smem:[#allocation2 + $0x1]]
    %s26 = sld [smem:[#allocation2 + $0x2]]
    %v27 = vld [vmem:[%s1] sm:$0xff]
    %v28 = vld [vmem:[%s1 + $0x8] sm:$0xff]
    %v29 = vstv %s24
    %v30 = vadd.f32 %v27, %v29
    %v31 = vadd.f32 %v28, %v29
    %v32 = vmax.f32 %v30, 1e-15
    %v33 = vmax.f32 %v31, 1e-15
    %v34 = vlog2.pop %v32
    %v35 = vmul.f32 %v34, 0.6931472
    %v36 = vlog2.pop %v33
    %v37 = vmul.f32 %v36, 0.6931472
    %v38 = vrcp.pop 0.6931472
    %v39 = vmul.f32 0.6931472, %v38
    %v40 = vsub.f32 1.0, %v39
    %v41 = vmul.f32 %v38, %v40
    %v42 = vadd.f32 %v38, %v41
    %vm43 = vweird.f32 %v38
    %v44 = vsel %vm43, %v38, %v42
    %v45 = vmul.f32 %v35, %v44
    %v46 = vmul.f32 %v37, %v44
    %v47 = vstv %s26
    %vm48 = vcmp.lt.f32.partialorder %v45, %v47
    %vm49 = vcmp.lt.f32.partialorder %v46, %v47
    %s50 = sld [smem:[#allocation2 + $0x4]]
    %s51 = sld [smem:[#allocation2 + $0x6]]
    %s52 = sld [smem:[#allocation2 + $0x3]]
    %v53 = vstv %s52
    %vm54 = vcmp.lt.f32.partialorder %v45, %v53
    %vm55 = vcmp.lt.f32.partialorder %v46, %v53
    %s56 = sld [smem:[#allocation2 + $0x5]]
    %v57 = vstv %s56
    %v58 = vstv %s50
    %v59 = vsel %vm54, %v57, %v58
    %v60 = vsel %vm55, %v57, %v58
    %s61 = sld [smem:[#allocation2 + $0x7]]
    %v62 = vstv %s61
    %v63 = vstv %s51
    %v64 = vsel %vm54, %v62, %v63
    %v65 = vsel %vm55, %v62, %v63
    %v66 = vmul.f32 %v45, %v59
    %v67 = vmul.f32 %v46, %v60
    %v68 = vround.ne.pseudo %v66
    %v69 = vround.ne.pseudo %v67
    %v70 = vmax.f32 %v68, 0.0
    %v71 = vmax.f32 %v69, 0.0
    %v72 = vmin.f32 %v70, 15.0
    %v73 = vmin.f32 %v71, 15.0
    %v74 = vmul.f32 %v72, %v64
    %v75 = vmul.f32 %v73, %v65
    %v76 = vpow.pop %v74
    %v77 = vpow.pop %v75
    %v78 = vstv %s25
    %v79 = vmul.f32 %v76, %v78
    %v80 = vmul.f32 %v77, %v78
    %v81 = vsel %vm48, %v79, 0.0
    %v82 = vsel %vm49, %v80, 0.0
    %v83 = vsub.f32 %v81, %v29
    %v84 = vsub.f32 %v82, %v29
    %85 = vst [vmem:[%s2] sm:$0xff] %v83
    %86 = vst [vmem:[%s2 + $0x8] sm:$0xff] %v84
    // Predicated region
    $region14: #{adalog_quantize.1} parent=1 // pred_check
      _
    $region15: #{adalog_quantize.1} parent=1 // pred_check_branch
      %88 = sbr.rel (0) target = $region17
    $region16: #{adalog_quantize.1} parent=1 // pred_region
      _
    $region17: #{adalog_quantize.1} parent=1 // pred_fallthru
      _
    // Predicated region
    $region18: #{adalog_quantize.1} parent=1 // pred_check
      _
    $region19: #{adalog_quantize.1} parent=1 // pred_check_branch
      %90 = sbr.rel (0) target = $region21
    $region20: #{adalog_quantize.1} parent=1 // pred_region
      _
    $region21: #{adalog_quantize.1} parent=1 // pred_fallthru
      _
    %91 = vsyncpa [#allocation3], 1

</llo_original>
